<compile_context>
chip_gen: v7x
topology: tpu7x:2x2x1
jax: 0.10.0
libtpu: 0.0.40
codegen_flags: <defaults>
</compile_context>

<pallas_src>
import jax
import jax.numpy as jnp
from jax.experimental import pallas as pl
from jax.experimental.pallas import tpu as pltpu


def _round_up(x, m):
    return (x + m - 1) // m * m


def _make_critic_kernel(n_features, action_dim, hidden, o_w1, o_w2, split_l2,
                        w_dtype):
    """Build the kernel with static slab offsets / layout flags baked in."""
    H = hidden
    H2 = 2 * hidden
    d_in = n_features + action_dim
    f32 = jnp.float32

    def kernel(obs_ref, act_ref, w_ref, out_ref):
        # Inputs arrive f32; cast to the weight dtype only for the MXU dots.
        obs = obs_ref[...].astype(w_dtype)            # (B, nf)
        act = act_ref[...].astype(w_dtype)            # (B, ad)

        # --- header section (rows 0..7 of the slab) ------------------------
        # row 0: b1 (fused), row 1: b2 (fused),
        # row 2: b3 packed in lanes 0/1, row 3: w3^T (lanes [:H]=q1, [H:]=q2)
        b1 = w_ref[0:1, :].astype(f32)                 # (1, 2H)
        b2 = w_ref[1:2, :].astype(f32)                 # (1, 2H)
        b3 = w_ref[2:3, 0:2].astype(f32)               # (1, 2)
        w3t = w_ref[3:4, :].astype(f32)                # (1, 2H)

        # --- layer 1: concat folded into a split matmul (exact) ------------
        w1o = w_ref[o_w1:o_w1 + n_features, :]         # (nf, 2H)
        w1a = w_ref[o_w1 + n_features:o_w1 + d_in, :]  # (ad, 2H)
        h1 = (jnp.dot(obs, w1o, preferred_element_type=f32)
              + jnp.dot(act, w1a, preferred_element_type=f32)
              + b1)
        h1 = jnp.maximum(h1, 0.0)                      # (B, 2H) f32

        # --- layer 2 --------------------------------------------------------
        if split_l2:
            # Two independent HxH dots on the lane halves (H % 128 == 0, so
            # slices/concat are vreg-aligned).  Half the DMA / MXU passes of
            # the block-diagonal form.
            h1a = h1[:, :H].astype(w_dtype)
            h1b = h1[:, H:].astype(w_dtype)
            w2a = w_ref[o_w2:o_w2 + H, 0:H]            # Q1 block (H, H)
            w2b = w_ref[o_w2:o_w2 + H, H:H2]           # Q2 block (H, H)
            h2 = jnp.concatenate(
                [jnp.dot(h1a, w2a, preferred_element_type=f32),
                 jnp.dot(h1b, w2b, preferred_element_type=f32)], axis=-1) + b2
        else:
            # Tiny H: keep the fused block-diagonal (2H, 2H) form.
            w2 = w_ref[o_w2:o_w2 + H2, :]
            h2 = jnp.dot(h1.astype(w_dtype), w2,
                         preferred_element_type=f32) + b2
        h2 = jnp.maximum(h2, 0.0)                      # (B, 2H) f32

        # --- layer 3: VPU multiply + lane reduction (no MXU, no zero pad) ---
        prod = h2 * w3t                                # (B, 2H) f32
        lane = jax.lax.broadcasted_iota(jnp.int32, prod.shape, dimension=1)
        q1 = jnp.sum(jnp.where(lane < H, prod, 0.0), axis=-1, keepdims=True)
        q2 = jnp.sum(jnp.where(lane >= H, prod, 0.0), axis=-1, keepdims=True)
        out_ref[...] = (jnp.concatenate([q1, q2], axis=-1) + b3
                        ).astype(out_ref.dtype)        # (B, 2)

    return kernel


def pack_critic_params(params, n_features, action_dim, hidden,
                       w_dtype=jnp.bfloat16):
    """Fuse Q1/Q2 params and pack them into one (rows, 2H) slab (w_dtype).

    Slab layout (all lanes = 2H wide, offsets 8-row aligned):
      rows 0..7 : header (b1, b2, b3-in-lanes-0/1, w3^T, rest zero)
      rows o_w1 : fused layer-1 weight, obs rows then action rows (d_in rows)
      rows o_w2 : layer-2 weight
                    H % 128 == 0 -> two HxH blocks side by side  (H rows)
                    otherwise    -> block-diagonal (2H, 2H)      (2H rows)
    Done once outside the kernel (plain-JAX glue).
    """
    H = hidden
    H2 = 2 * H
    d_in = n_features + action_dim
    p1, p2 = params["q1"], params["q2"]
    split_l2 = (H % 128 == 0)

    o_w1 = 8
    o_w2 = o_w1 + _round_up(d_in, 8)
    w2_rows = H if split_l2 else H2
    total_rows = o_w2 + _round_up(w2_rows, 8)

    slab = jnp.zeros((total_rows, H2), jnp.float32)

    # Header.
    slab = slab.at[0, :H].set(p1["b1"][0]).at[0, H:].set(p2["b1"][0])
    slab = slab.at[1, :H].set(p1["b2"][0]).at[1, H:].set(p2["b2"][0])
    slab = slab.at[2, 0].set(p1["b3"][0, 0]).at[2, 1].set(p2["b3"][0, 0])
    slab = slab.at[3, :H].set(p1["w3"][:, 0]).at[3, H:].set(p2["w3"][:, 0])

    # Layer 1: fuse heads along lanes; obs rows then action rows.
    w1f = jnp.concatenate([p1["w1"], p2["w1"]], axis=1)          # (d_in, 2H)
    slab = slab.at[o_w1:o_w1 + d_in, :].set(w1f)

    # Layer 2.
    if split_l2:
        w2f = jnp.concatenate([p1["w2"], p2["w2"]], axis=1)      # (H, 2H)
        slab = slab.at[o_w2:o_w2 + H, :].set(w2f)
    else:
        zH = jnp.zeros((H, H), jnp.float32)
        w2f = jnp.block([[p1["w2"], zH], [zH, p2["w2"]]])        # (2H, 2H)
        slab = slab.at[o_w2:o_w2 + H2, :].set(w2f)

    slab = slab.astype(w_dtype)
    meta = {"o_w1": o_w1, "o_w2": o_w2, "split_l2": split_l2, "w_dtype": w_dtype}
    return slab, meta


def critic_forward(obs, action, slab, meta, n_features, action_dim, hidden):
    """One pallas_call: 3 input DMAs (obs, action, packed slab), (B, 2) output."""
    B = obs.shape[0]
    kernel = _make_critic_kernel(n_features, action_dim, hidden,
                                 meta["o_w1"], meta["o_w2"], meta["split_l2"],
                                 meta["w_dtype"])
    rows, lanes = slab.shape

    if B >= 256 and B % 128 == 0:
        # Training-sized batch: grid over the batch so v7x's two TensorCores
        # each take a share; the slab is whole-array and resident.
        bt = 256 if B % 256 == 0 else 128
        q = pl.pallas_call(
            kernel,
            out_shape=jax.ShapeDtypeStruct((B, 2), jnp.float32),
            grid=(B // bt,),
            in_specs=[
                pl.BlockSpec((bt, n_features), lambda i: (i, 0)),
                pl.BlockSpec((bt, action_dim), lambda i: (i, 0)),
                pl.BlockSpec((rows, lanes), lambda i: (0, 0)),  # resident slab
            ],
            out_specs=pl.BlockSpec((bt, 2), lambda i: (i, 0)),
            compiler_params=pltpu.CompilerParams(
                dimension_semantics=("parallel",)),
        )(obs, action, slab)
    else:
        # Tiny batch (actor loop): no grid, whole-array VMEM blocks.
        vmem = pl.BlockSpec(memory_space=pltpu.MemorySpace.VMEM)
        q = pl.pallas_call(
            kernel,
            out_shape=jax.ShapeDtypeStruct((B, 2), jnp.float32),
            in_specs=[vmem, vmem, vmem],
            out_specs=vmem,
        )(obs, action, slab)

    # Slice the fused (B, 2) result back into q1/q2 (wrapper glue).
    return q[:, 0:1], q[:, 1:2]


def init_critic_params(key, n_features, action_dim, hidden_size):
    """Orthogonal weights (matching nn.init.orthogonal_), zero biases.

    PyTorch weights are (out, in); orthogonalize in that shape, then transpose
    so the kernel computes x @ W (== x @ W.T with the torch layout).
    """
    d_in = n_features + action_dim
    ortho = jax.nn.initializers.orthogonal()

    def make_q(k):
        k1, k2, k3 = jax.random.split(k, 3)
        w1 = ortho(k1, (hidden_size, d_in), jnp.float32).T
        w2 = ortho(k2, (hidden_size, hidden_size), jnp.float32).T
        w3 = ortho(k3, (1, hidden_size), jnp.float32).T
        return {
            "w1": w1, "b1": jnp.zeros((1, hidden_size), jnp.float32),
            "w2": w2, "b2": jnp.zeros((1, hidden_size), jnp.float32),
            "w3": w3, "b3": jnp.zeros((1, 1), jnp.float32),
        }

    kq1, kq2 = jax.random.split(key)
    return {"q1": make_q(kq1), "q2": make_q(kq2)}


def critic_reference(obs, action, params, w_dtype=jnp.float32):
    """Pure-JAX reference matching the PyTorch module.

    When w_dtype=bf16, weights (and matmul activations) are rounded to bf16 the
    same way the kernel does, so the comparison isolates structural errors.
    """
    f32 = jnp.float32

    def c(a):
        return a.astype(w_dtype).astype(f32)

    x = jnp.concatenate([obs, action], axis=-1)

    def mlp(p):
        h = jnp.maximum(c(x) @ c(p["w1"]) + p["b1"], 0.0)
        h = jnp.maximum(c(h) @ c(p["w2"]) + p["b2"], 0.0)
        # Linear(H, 1) as an explicit weighted sum (same math).
        return jnp.sum(h * c(p["w3"])[:, 0][None, :], axis=-1,
                       keepdims=True) + p["b3"]

    return mlp(params["q1"]), mlp(params["q2"])


if __name__ == "__main__":
    key = jax.random.PRNGKey(0)

    # (B, n_features, action_dim, hidden):
    #   tiny demo (fused block-diag layer-2 path, no grid),
    #   lane-aligned hidden (split layer-2 path, no grid),
    #   training-sized batch (grid over batch, megacore-parallel on v7x).
    configs = [
        (8, 28, 4, 32),
        (8, 28, 4, 128),
        (512, 28, 4, 128),
    ]

    for (B, nf, ad, H) in configs:
        key, k_obs, k_act, k_par = jax.random.split(key, 4)
        obs = jax.random.normal(k_obs, (B, nf), dtype=jnp.float32)
        action = jax.random.normal(k_act, (B, ad), dtype=jnp.float32)
        params = init_critic_params(k_par, nf, ad, H)

        for w_dtype, tol in ((jnp.float32, 1e-3), (jnp.bfloat16, 1e-2)):
            slab, meta = pack_critic_params(params, nf, ad, H, w_dtype)
            q1, q2 = critic_forward(obs, action, slab, meta, nf, ad, H)
            jax.block_until_ready((q1, q2))

            q1_ref, q2_ref = critic_reference(obs, action, params, w_dtype)
            assert q1.shape == (B, 1) and q2.shape == (B, 1)
            assert jnp.allclose(q1, q1_ref, atol=tol, rtol=tol), (B, H, w_dtype)
            assert jnp.allclose(q2, q2_ref, atol=tol, rtol=tol), (B, H, w_dtype)

    print("KERNEL_OK")
</pallas_src>

<mosaic_0001>
module attributes {stable_mosaic.version = 11 : i64} {
  func.func @kernel(%arg0: memref<8x28xf32, #tpu.memory_space<vmem>>, %arg1: memref<8x4xf32, #tpu.memory_space<vmem>>, %arg2: memref<104x64xf32, #tpu.memory_space<vmem>>, %arg3: memref<8x2xf32, #tpu.memory_space<vmem>>) attributes {dimension_semantics = [], scalar_prefetch = 0 : i64, scratch_operands = 0 : i64, tpu.core_type = #tpu.core_type<tc>} {
    %c0 = arith.constant 0 : index
    %c0_0 = arith.constant 0 : index
    %0 = vector.load %arg0[%c0, %c0_0] : memref<8x28xf32, #tpu.memory_space<vmem>>, vector<8x28xf32>
    %c0_1 = arith.constant 0 : index
    %c0_2 = arith.constant 0 : index
    %1 = vector.load %arg1[%c0_1, %c0_2] : memref<8x4xf32, #tpu.memory_space<vmem>>, vector<8x4xf32>
    %c0_3 = arith.constant 0 : index
    %c0_4 = arith.constant 0 : index
    %2 = vector.load %arg2[%c0_3, %c0_4] : memref<104x64xf32, #tpu.memory_space<vmem>>, vector<1x64xf32>
    %c1 = arith.constant 1 : index
    %c0_5 = arith.constant 0 : index
    %3 = vector.load %arg2[%c1, %c0_5] : memref<104x64xf32, #tpu.memory_space<vmem>>, vector<1x64xf32>
    %c2 = arith.constant 2 : index
    %c0_6 = arith.constant 0 : index
    %4 = vector.load %arg2[%c2, %c0_6] : memref<104x64xf32, #tpu.memory_space<vmem>>, vector<1x2xf32>
    %c3 = arith.constant 3 : index
    %c0_7 = arith.constant 0 : index
    %5 = vector.load %arg2[%c3, %c0_7] : memref<104x64xf32, #tpu.memory_space<vmem>>, vector<1x64xf32>
    %c8 = arith.constant 8 : index
    %c0_8 = arith.constant 0 : index
    %6 = vector.load %arg2[%c8, %c0_8] : memref<104x64xf32, #tpu.memory_space<vmem>>, vector<28x64xf32>
    %c36 = arith.constant 36 : index
    %c0_9 = arith.constant 0 : index
    %7 = vector.load %arg2[%c36, %c0_9] : memref<104x64xf32, #tpu.memory_space<vmem>>, vector<4x64xf32>
    %cst = arith.constant dense<0.000000e+00> : vector<8x64xf32>
    %8 = tpu.matmul %0, %6, %cst {dimension_numbers = #tpu.dot_dimension_numbers<[1], [0], [0], [1], [0, 0, 1, 1], [], []>} : vector<8x28xf32>, vector<28x64xf32>, vector<8x64xf32> -> vector<8x64xf32>
    %cst_10 = arith.constant dense<0.000000e+00> : vector<8x64xf32>
    %9 = tpu.matmul %1, %7, %cst_10 {dimension_numbers = #tpu.dot_dimension_numbers<[1], [0], [0], [1], [0, 0, 1, 1], [], []>} : vector<8x4xf32>, vector<4x64xf32>, vector<8x64xf32> -> vector<8x64xf32>
    %10 = arith.addf %8, %9 : vector<8x64xf32>
    %11 = vector.broadcast %2 : vector<1x64xf32> to vector<8x64xf32>
    %12 = arith.addf %10, %11 : vector<8x64xf32>
    %cst_11 = arith.constant 0.000000e+00 : f32
    %13 = vector.broadcast %cst_11 : f32 to vector<8x64xf32>
    %14 = arith.maximumf %12, %13 : vector<8x64xf32>
    %c40 = arith.constant 40 : index
    %c0_12 = arith.constant 0 : index
    %15 = vector.load %arg2[%c40, %c0_12] : memref<104x64xf32, #tpu.memory_space<vmem>>, vector<64x64xf32>
    %cst_13 = arith.constant dense<0.000000e+00> : vector<8x64xf32>
    %16 = tpu.matmul %14, %15, %cst_13 {dimension_numbers = #tpu.dot_dimension_numbers<[1], [0], [0], [1], [0, 0, 1, 1], [], []>} : vector<8x64xf32>, vector<64x64xf32>, vector<8x64xf32> -> vector<8x64xf32>
    %17 = vector.broadcast %3 : vector<1x64xf32> to vector<8x64xf32>
    %18 = arith.addf %16, %17 : vector<8x64xf32>
    %cst_14 = arith.constant 0.000000e+00 : f32
    %19 = vector.broadcast %cst_14 : f32 to vector<8x64xf32>
    %20 = arith.maximumf %18, %19 : vector<8x64xf32>
    %21 = vector.broadcast %5 : vector<1x64xf32> to vector<8x64xf32>
    %22 = arith.mulf %20, %21 : vector<8x64xf32>
    %23 = tpu.iota {dimensions = array<i32: 1>} : vector<8x64xi32>
    %c32_i32 = arith.constant 32 : i32
    %24 = vector.broadcast %c32_i32 : i32 to vector<8x64xi32>
    %25 = arith.cmpi slt, %23, %24 : vector<8x64xi32>
    %cst_15 = arith.constant 0.000000e+00 : f32
    %26 = vector.broadcast %cst_15 : f32 to vector<8x64xf32>
    %27 = arith.select %25, %22, %26 : vector<8x64xi1>, vector<8x64xf32>
    %cst_16 = arith.constant dense<0.000000e+00> : vector<8xf32>
    %28 = vector.multi_reduction <add>, %27, %cst_16 [1] : vector<8x64xf32> to vector<8xf32>
    %29 = vector.shape_cast %28 : vector<8xf32> to vector<8x1xf32>
    %c32_i32_17 = arith.constant 32 : i32
    %30 = vector.broadcast %c32_i32_17 : i32 to vector<8x64xi32>
    %31 = arith.cmpi sge, %23, %30 : vector<8x64xi32>
    %cst_18 = arith.constant 0.000000e+00 : f32
    %32 = vector.broadcast %cst_18 : f32 to vector<8x64xf32>
    %33 = arith.select %31, %22, %32 : vector<8x64xi1>, vector<8x64xf32>
    %cst_19 = arith.constant dense<0.000000e+00> : vector<8xf32>
    %34 = vector.multi_reduction <add>, %33, %cst_19 [1] : vector<8x64xf32> to vector<8xf32>
    %35 = vector.shape_cast %34 : vector<8xf32> to vector<8x1xf32>
    %36 = tpu.concatenate %29, %35 in 1 : vector<8x1xf32>, vector<8x1xf32> -> vector<8x2xf32>
    %37 = vector.broadcast %4 : vector<1x2xf32> to vector<8x2xf32>
    %38 = arith.addf %36, %37 : vector<8x2xf32>
    %c0_20 = arith.constant 0 : index
    %c0_21 = arith.constant 0 : index
    %39 = vector.load %arg3[%c0_20, %c0_21] : memref<8x2xf32, #tpu.memory_space<vmem>>, vector<8x2xf32>
    tpu.vector_store %arg3[%c0_20, %c0_21], %38 {strides = array<i32>} : memref<8x2xf32, #tpu.memory_space<vmem>>, vector<8x2xf32>,
    return
  }
}

</mosaic_0001>

<llo_original>
// kernel: tpu_custom_call.1
$region0: #{tpu_custom_call.1}
  #allocation0 [shape = 'u32[]', space=smem, size = 0x4, offset = 0x4, fixed_abs, tag = 'smem constant byte address 0x4 - core index']
  #allocation1 [shape = 'u32[144,128]{1,0:T(1,128)}', space=vmem, size = 0x12000, scoped, tag = 'internal scratch']
  %s0 = inlined_call_operand.vmem [shape: f32[8,28], index: 0, kind: input, shape index: {}]
  %s1 = inlined_call_operand.vmem [shape: f32[8,4], index: 1, kind: input, shape index: {}]
  %s2 = inlined_call_operand.vmem [shape: f32[104,64], index: 2, kind: input, shape index: {}]
  %s3 = inlined_call_operand.vmem [shape: f32[8,2], index: 3, kind: output, shape index: {}]
  %s4 = sld [smem:[#allocation0]]
  $region22: #{tpu_custom_call.1} parent=0
    _
  %s6 = ssub.s32 1, %s4
  %s7 = scalar_select 0, %s6, %s4
  // Predicated region
  $region2: #{tpu_custom_call.1} parent=0 // pred_check
    _
  $region3: #{tpu_custom_call.1} parent=0 // pred_check_branch
    %9 = sbr.rel (0) target = $region5
  $region4: #{tpu_custom_call.1} parent=0 // pred_region
    _
  $region5: #{tpu_custom_call.1} parent=0 // pred_fallthru
    _
  // Predicated region
  $region6: #{tpu_custom_call.1} parent=0 // pred_check
    _
  $region7: #{tpu_custom_call.1} parent=0 // pred_check_branch
    %11 = sbr.rel (0) target = $region9
  $region8: #{tpu_custom_call.1} parent=0 // pred_region
    _
  $region9: #{tpu_custom_call.1} parent=0 // pred_fallthru
    _
  // Predicated region
  $region10: #{tpu_custom_call.1} parent=0 // pred_check
    _
  $region11: #{tpu_custom_call.1} parent=0 // pred_check_branch
    %13 = sbr.rel (0) target = $region13
  $region12: #{tpu_custom_call.1} parent=0 // pred_region
    _
  $region13: #{tpu_custom_call.1} parent=0 // pred_fallthru
    _
  %v14 = vld [vmem:[%s0] sm:$0xff]
  %v15 = vld [vmem:[%s1] sm:$0xff]
  %v16 = vld [vmem:[%s2] sm:$0x1]
  %v17 = vld [vmem:[%s2 + $0x1] sm:$0x1]
  %v18 = vld [vmem:[%s2 + $0x2] sm:$0x1]
  %v19 = vld [vmem:[%s2 + $0x3] sm:$0x1]
  %v20 = vld [vmem:[%s2 + $0x8] sm:$0xff]
  %v21 = vld [vmem:[%s2 + $0x10] sm:$0xff]
  %v22 = vld [vmem:[%s2 + $0x18] sm:$0xff]
  %v23 = vld [vmem:[%s2 + $0x20] sm:$0xf]
  %v24 = vld [vmem:[%s2 + $0x24] sm:$0xf]
  %vm25 = vcmask 31744
  %v27 = vsel %vm25, %v15, 0
  %vm29 = vcmask 1043456
  %v31 = vsel %vm29, %v24, 0
  %33 = vmatprep.subr.mxu0 0.0
  %34 = vmatpush1.msra.mxu0 %v31
  %35 = vmatprep.subr.mxu0 0.0
  %36 = vmatpush1.msra.mxu0 0.0
  %37 = vmatprep.subr.mxu0 0.0
  %38 = vmatpush1.msra.mxu0 0.0
  %39 = vmatprep.subr.mxu0 0.0
  %40 = vmatpush1.msra.mxu0 0.0
  %41 = vmatprep.subr.mxu0 0.0
  %42 = vmatpush1.msra.mxu0 0.0
  %43 = vmatprep.subr.mxu0 0.0
  %44 = vmatpush1.msra.mxu0 0.0
  %45 = vmatprep.subr.mxu0 0.0
  %46 = vmatpush1.msra.mxu0 0.0
  %47 = vmatprep.subr.mxu0 0.0
  %48 = vmatpush1.msra.mxu0 0.0
  %49 = vmatprep.subr.mxu0 0.0
  %50 = vmatpush1.msra.mxu0 0.0
  %51 = vmatprep.subr.mxu0 0.0
  %52 = vmatpush1.msra.mxu0 0.0
  %53 = vmatprep.subr.mxu0 0.0
  %54 = vmatpush1.msra.mxu0 0.0
  %55 = vmatprep.subr.mxu0 0.0
  %56 = vmatpush1.msra.mxu0 0.0
  %57 = vmatprep.subr.mxu0 0.0
  %58 = vmatpush1.msra.mxu0 0.0
  %59 = vmatprep.subr.mxu0 0.0
  %60 = vmatpush1.msra.mxu0 0.0
  %61 = vmatprep.subr.mxu0 0.0
  %62 = vmatpush1.msra.mxu0 0.0
  %63 = vmatprep.subr.mxu0 0.0
  %64 = vmatpush1.msra.mxu0 0.0
  %65 = vmatprep.subr.mxu0 0.0
  %66 = vmatpush1.msra.mxu0 0.0
  %67 = vmatprep.subr.mxu0 0.0
  %68 = vmatpush1.msra.mxu0 0.0
  %69 = vmatprep.subr.mxu0 0.0
  %70 = vmatpush1.msra.mxu0 0.0
  %71 = vmatprep.subr.mxu0 0.0
  %72 = vmatpush1.msra.mxu0 0.0
  %73 = vmatprep.subr.mxu0 0.0
  %74 = vmatpush1.msra.mxu0 0.0
  %75 = vmatprep.subr.mxu0 0.0
  %76 = vmatpush1.msra.mxu0 0.0
  %77 = vmatprep.subr.mxu0 0.0
  %78 = vmatpush1.msra.mxu0 0.0
  %79 = vmatprep.subr.mxu0 0.0
  %80 = vmatpush1.msra.mxu0 0.0
  %81 = vmatprep.subr.mxu0 0.0
  %82 = vmatpush1.msra.mxu0 0.0
  %83 = vmatprep.subr.mxu0 0.0
  %84 = vmatpush1.msra.mxu0 0.0
  %85 = vmatprep.subr.mxu0 0.0
  %86 = vmatpush1.msra.mxu0 0.0
  %87 = vmatprep.subr.mxu0 0.0
  %88 = vmatpush1.msra.mxu0 0.0
  %89 = vmatprep.subr.mxu0 0.0
  %90 = vmatpush1.msra.mxu0 0.0
  %91 = vmatprep.subr.mxu0 0.0
  %92 = vmatpush1.msra.mxu0 0.0
  %93 = vmatprep.subr.mxu0 0.0
  %94 = vmatpush1.msra.mxu0 0.0
  %95 = vmatprep.subr.mxu0 0.0
  %96 = vmatpush1.msra.mxu0 0.0
  %97 = vmatprep.mubr.f32.mxu0 0.0
  %98 = vmatmul.mubr.f32.gmra.mrb[0].mxu0 %v27
  %v99 = vpop.f32.mrb[0].mxu0
  %v100 = vadd.f32 0.0, %v99
  %v101 = vpop.f32.mrb[0].mxu0
  %102 = vdwg.mxu0
  %vm103 = vcmask 228352
  %v105 = vsel %vm103, %v14, 0
  %v108 = vsel %vm29, %v23, 0
  %110 = vmatprep.subr.mxu0 0.0
  %111 = vmatpush1.msra.mxu0 %v20
  %112 = vmatprep.subr.mxu0 0.0
  %113 = vmatpush1.msra.mxu0 %v21
  %114 = vmatprep.subr.mxu0 0.0
  %115 = vmatpush1.msra.mxu0 %v22
  %116 = vmatprep.subr.mxu0 0.0
  %117 = vmatpush1.msra.mxu0 %v108
  %118 = vmatprep.subr.mxu0 0.0
  %119 = vmatpush1.msra.mxu0 0.0
  %120 = vmatprep.subr.mxu0 0.0
  %121 = vmatpush1.msra.mxu0 0.0
  %122 = vmatprep.subr.mxu0 0.0
  %123 = vmatpush1.msra.mxu0 0.0
  %124 = vmatprep.subr.mxu0 0.0
  %125 = vmatpush1.msra.mxu0 0.0
  %126 = vmatprep.subr.mxu0 0.0
  %127 = vmatpush1.msra.mxu0 0.0
  %128 = vmatprep.subr.mxu0 0.0
  %129 = vmatpush1.msra.mxu0 0.0
  %130 = vmatprep.subr.mxu0 0.0
  %131 = vmatpush1.msra.mxu0 0.0
  %132 = vmatprep.subr.mxu0 0.0
  %133 = vmatpush1.msra.mxu0 0.0
  %134 = vmatprep.subr.mxu0 0.0
  %135 = vmatpush1.msra.mxu0 0.0
  %136 = vmatprep.subr.mxu0 0.0
  %137 = vmatpush1.msra.mxu0 0.0
  %138 = vmatprep.subr.mxu0 0.0
  %139 = vmatpush1.msra.mxu0 0.0
  %140 = vmatprep.subr.mxu0 0.0
  %141 = vmatpush1.msra.mxu0 0.0
  %142 = vmatprep.subr.mxu0 0.0
  %143 = vmatpush1.msra.mxu0 0.0
  %144 = vmatprep.subr.mxu0 0.0
  %145 = vmatpush1.msra.mxu0 0.0
  %146 = vmatprep.subr.mxu0 0.0
  %147 = vmatpush1.msra.mxu0 0.0
  %148 = vmatprep.subr.mxu0 0.0
  %149 = vmatpush1.msra.mxu0 0.0
  %150 = vmatprep.subr.mxu0 0.0
  %151 = vmatpush1.msra.mxu0 0.0
  %152 = vmatprep.subr.mxu0 0.0
  %153 = vmatpush1.msra.mxu0 0.0
  %154 = vmatprep.subr.mxu0 0.0
  %155 = vmatpush1.msra.mxu0 0.0
  %156 = vmatprep.subr.mxu0 0.0
  %157 = vmatpush1.msra.mxu0 0.0
  %158 = vmatprep.subr.mxu0 0.0
  %159 = vmatpush1.msra.mxu0 0.0
  %160 = vmatprep.subr.mxu0 0.0
  %161 = vmatpush1.msra.mxu0 0.0
  %162 = vmatprep.subr.mxu0 0.0
  %163 = vmatpush1.msra.mxu0 0.0
  %164 = vmatprep.subr.mxu0 0.0
  %165 = vmatpush1.msra.mxu0 0.0
  %166 = vmatprep.subr.mxu0 0.0
  %167 = vmatpush1.msra.mxu0 0.0
  %168 = vmatprep.subr.mxu0 0.0
  %169 = vmatpush1.msra.mxu0 0.0
  %170 = vmatprep.subr.mxu0 0.0
  %171 = vmatpush1.msra.mxu0 0.0
  %172 = vmatprep.subr.mxu0 0.0
  %173 = vmatpush1.msra.mxu0 0.0
  %174 = vmatprep.mubr.f32.mxu0 0.0
  %175 = vmatmul.mubr.f32.gmra.mrb[0].mxu0 %v105
  %v176 = vpop.f32.mrb[0].mxu0
  %v177 = vadd.f32 %v100, %v176
  %v178 = vpop.f32.mrb[0].mxu0
  %179 = vdwg.mxu0
  %v180 = vlaneseq
  %v181 = vshrl.u32 %v180, 7
  %v182 = vsub.s32 0, %v181
  %v183 = vrot.slane %v16, %v182
  %v184 = vadd.f32 %v177, %v183
  %v185 = vmax.f32 %v184, 0.0
  %v186 = vld [vmem:[%s2 + $0x28] sm:$0xff]
  %v187 = vld [vmem:[%s2 + $0x30] sm:$0xff]
  %v188 = vld [vmem:[%s2 + $0x38] sm:$0xff]
  %v189 = vld [vmem:[%s2 + $0x40] sm:$0xff]
  %v190 = vld [vmem:[%s2 + $0x48] sm:$0xff]
  %v191 = vld [vmem:[%s2 + $0x50] sm:$0xff]
  %v192 = vld [vmem:[%s2 + $0x58] sm:$0xff]
  %v193 = vld [vmem:[%s2 + $0x60] sm:$0xff]
  %v194 = vlaneseq
  %v195 = vshrl.u32 %v194, 7
  %v196 = vsub.s32 0, %v195
  %v197 = vrot.slane %v17, %v196
  %vm198 = vcmask 523264
  %v200 = vsel %vm198, %v185, 0
  %202 = vmatprep.subr.mxu0 0.0
  %203 = vmatpush1.msra.mxu0 %v186
  %204 = vmatprep.subr.mxu0 0.0
  %205 = vmatpush1.msra.mxu0 %v187
  %206 = vmatprep.subr.mxu0 0.0
  %207 = vmatpush1.msra.mxu0 %v188
  %208 = vmatprep.subr.mxu0 0.0
  %209 = vmatpush1.msra.mxu0 %v189
  %210 = vmatprep.subr.mxu0 0.0
  %211 = vmatpush1.msra.mxu0 %v190
  %212 = vmatprep.subr.mxu0 0.0
  %213 = vmatpush1.msra.mxu0 %v191
  %214 = vmatprep.subr.mxu0 0.0
  %215 = vmatpush1.msra.mxu0 %v192
  %216 = vmatprep.subr.mxu0 0.0
  %217 = vmatpush1.msra.mxu0 %v193
  %218 = vmatprep.subr.mxu0 0.0
  %219 = vmatpush1.msra.mxu0 0.0
  %220 = vmatprep.subr.mxu0 0.0
  %221 = vmatpush1.msra.mxu0 0.0
  %222 = vmatprep.subr.mxu0 0.0
  %223 = vmatpush1.msra.mxu0 0.0
  %224 = vmatprep.subr.mxu0 0.0
  %225 = vmatpush1.msra.mxu0 0.0
  %226 = vmatprep.subr.mxu0 0.0
  %227 = vmatpush1.msra.mxu0 0.0
  %228 = vmatprep.subr.mxu0 0.0
  %229 = vmatpush1.msra.mxu0 0.0
  %230 = vmatprep.subr.mxu0 0.0
  %231 = vmatpush1.msra.mxu0 0.0
  %232 = vmatprep.subr.mxu0 0.0
  %233 = vmatpush1.msra.mxu0 0.0
  %234 = vmatprep.subr.mxu0 0.0
  %235 = vmatpush1.msra.mxu0 0.0
  %236 = vmatprep.subr.mxu0 0.0
  %237 = vmatpush1.msra.mxu0 0.0
  %238 = vmatprep.subr.mxu0 0.0
  %239 = vmatpush1.msra.mxu0 0.0
  %240 = vmatprep.subr.mxu0 0.0
  %241 = vmatpush1.msra.mxu0 0.0
  %242 = vmatprep.subr.mxu0 0.0
  %243 = vmatpush1.msra.mxu0 0.0
  %244 = vmatprep.subr.mxu0 0.0
  %245 = vmatpush1.msra.mxu0 0.0
  %246 = vmatprep.subr.mxu0 0.0
  %247 = vmatpush1.msra.mxu0 0.0
  %248 = vmatprep.subr.mxu0 0.0
  %249 = vmatpush1.msra.mxu0 0.0
  %250 = vmatprep.subr.mxu0 0.0
  %251 = vmatpush1.msra.mxu0 0.0
  %252 = vmatprep.subr.mxu0 0.0
  %253 = vmatpush1.msra.mxu0 0.0
  %254 = vmatprep.subr.mxu0 0.0
  %255 = vmatpush1.msra.mxu0 0.0
  %256 = vmatprep.subr.mxu0 0.0
  %257 = vmatpush1.msra.mxu0 0.0
  %258 = vmatprep.subr.mxu0 0.0
  %259 = vmatpush1.msra.mxu0 0.0
  %260 = vmatprep.subr.mxu0 0.0
  %261 = vmatpush1.msra.mxu0 0.0
  %262 = vmatprep.subr.mxu0 0.0
  %263 = vmatpush1.msra.mxu0 0.0
  %264 = vmatprep.subr.mxu0 0.0
  %265 = vmatpush1.msra.mxu0 0.0
  %266 = vmatprep.mubr.f32.mxu0 0.0
  %267 = vmatmul.mubr.f32.gmra.mrb[0].mxu0 %v200
  %v268 = vpop.f32.mrb[0].mxu0
  %v269 = vadd.f32 %v197, %v268
  %v270 = vpop.f32.mrb[0].mxu0
  %271 = vdwg.mxu0
  %v272 = vmax.f32 %v269, 0.0
  %v273 = vlaneseq
  %v274 = vshrl.u32 %v273, 7
  %v275 = vsub.s32 0, %v274
  %v276 = vrot.slane %v19, %v275
  %v277 = vmul.f32 %v272, %v276
  %v278 = vlaneseq
  %v279 = vand.u32 %v278, 127
  %vm280 = vcmp.lt.s32.totalorder %v279, 32
  %v281 = vsel %vm280, %v277, 0.0
  %v282 = vsel %vm198, %v281, 0.0
  %283 = vadd.xlane.f32.xlu0 %v282
  %v284 = vpop.xlane.xlu0 %283
  %vm285 = vcmp.ge.s32.totalorder %v279, 32
  %v286 = vsel %vm285, %v277, 0.0
  %v287 = vsel %vm198, %v286, 0.0
  %288 = vadd.xlane.f32.xlu0 %v287
  %v289 = vpop.xlane.xlu0 %288
  %vm290 = vcmask 7168
  %v291 = vsel %vm290, %v284, %v289
  %v292 = vlaneseq
  %v293 = vshrl.u32 %v292, 7
  %v294 = vsub.s32 0, %v293
  %v295 = vrot.slane %v18, %v294
  %v296 = vadd.f32 %v291, %v295
  %vm297 = vcmask 15360
  %298 = vst.msk [vmem:[%s3] sm:$0xff] %vm297, %v296
  // Predicated region
  $region14: #{tpu_custom_call.1} parent=0 // pred_check
    _
  $region15: #{tpu_custom_call.1} parent=0 // pred_check_branch
    %300 = sbr.rel (0) target = $region17
  $region16: #{tpu_custom_call.1} parent=0 // pred_region
    _
  $region17: #{tpu_custom_call.1} parent=0 // pred_fallthru
    _
  // Predicated region
  $region18: #{tpu_custom_call.1} parent=0 // pred_check
    _
  $region19: #{tpu_custom_call.1} parent=0 // pred_check_branch
    %302 = sbr.rel (0) target = $region21
  $region20: #{tpu_custom_call.1} parent=0 // pred_region
    _
  $region21: #{tpu_custom_call.1} parent=0 // pred_fallthru
    _

</llo_original>
